<compile_context>
chip_gen: v7x
topology: tpu7x:2x2x1
jax: 0.10.0
libtpu: 0.0.40
codegen_flags: <defaults>
</compile_context>

<pallas_src>
import functools

import jax
import jax.numpy as jnp
from jax.experimental import pallas as pl
from jax.experimental.pallas import tpu as pltpu

SMOOTH = 1e-05


def _pick_block_rows(H, C, W, itemsize, target_bytes=2 << 20):
    """Largest sublane-aligned divisor of H whose score block <= target_bytes."""
    # Keep the second-minor dim a multiple of the packed-sublane count for the
    # input dtype (8 for f32, 16 for bf16, 32 for int8) whenever possible.
    step = 8 * max(1, 4 // max(1, itemsize))
    cands = [d for d in range(step, H + 1, step) if H % d == 0]
    if not cands:
        cands = [d for d in range(8, H + 1, 8) if H % d == 0]
    if not cands:
        return H  # no aligned divisor: block spans full H (still legal)
    fitting = [d for d in cands if C * d * W * itemsize <= target_bytes]
    return max(fitting) if fitting else min(cands)


def _dice_partial_kernel(x_ref, t_ref, out_ref, *, n_classes):
    # x_ref  : (1, C, Hb, W)  native input dtype (cast to f32 only in-register)
    # t_ref  : (1, 1, Hb, W)  int32 labels
    # out_ref: (1, C, 3, W)   float32 running partial sums (resident across h)
    @pl.when(pl.program_id(1) == 0)
    def _init():
        out_ref[...] = jnp.zeros_like(out_ref)

    labels = t_ref[0, 0]                                        # (Hb, W) int32
    for c in range(n_classes):                                  # small, unrolled
        score = x_ref[0, c].astype(jnp.float32)                 # (Hb, W)
        mask = labels == c                                      # one-hot slice
        inter = jnp.sum(jnp.where(mask, score, 0.0),
                        axis=0, keepdims=True)                  # (1, W)
        y_sum = jnp.sum(mask.astype(jnp.float32),
                        axis=0, keepdims=True)                  # (1, W) t == t*t
        z_sum = jnp.sum(score * score, axis=0, keepdims=True)   # (1, W)
        upd = jnp.concatenate([inter, y_sum, z_sum], axis=0)    # (3, W)
        out_ref[0, c] += upd                                    # one RMW / class


@functools.partial(jax.jit, static_argnames=("n_classes", "softmax"))
def dice_loss(inputs, target, n_classes, weight=None, softmax=False):
    """Pallas equivalent of DiceLoss(n_classes, onehot=True).forward."""
    if softmax:
        inputs = jax.nn.softmax(inputs, axis=1)

    N, C, H, W = inputs.shape
    assert C == n_classes, "predict & target shape do not match"
    target = target.astype(jnp.int32)      # no-op when labels are already int32

    Hb = _pick_block_rows(H, C, W, inputs.dtype.itemsize)
    grid = (N, H // Hb)

    partials = pl.pallas_call(
        functools.partial(_dice_partial_kernel, n_classes=C),
        out_shape=jax.ShapeDtypeStruct((N, C, 3, W), jnp.float32),
        grid_spec=pltpu.PrefetchScalarGridSpec(
            num_scalar_prefetch=0,
            grid=grid,
            in_specs=[
                pl.BlockSpec((1, C, Hb, W), lambda n, h: (n, 0, h, 0)),
                pl.BlockSpec((1, 1, Hb, W), lambda n, h: (n, 0, h, 0)),
            ],
            out_specs=pl.BlockSpec((1, C, 3, W), lambda n, h: (n, 0, 0, 0)),
        ),
        compiler_params=pltpu.CompilerParams(
            dimension_semantics=("parallel", "arbitrary"),
        ),
    )(inputs, target)

    # Tiny epilogue in plain JAX: reduce the (N, C, 3, W) partials, apply the
    # dice formula per class and the weighted mean over classes.
    sums = jnp.sum(partials, axis=(0, 3))                       # (C, 3)
    intersect, y_sum, z_sum = sums[:, 0], sums[:, 1], sums[:, 2]
    dice = 1.0 - (2.0 * intersect + SMOOTH) / (z_sum + y_sum + SMOOTH)

    if weight is None:
        w = jnp.ones((C,), jnp.float32)
    else:
        w = jnp.asarray(weight, jnp.float32)
    return jnp.sum(dice * w) / n_classes


def _ref_dice_loss(inputs, target, n_classes, weight=None, softmax=False):
    """Pure-JAX reference mirroring the PyTorch module exactly."""
    if softmax:
        inputs = jax.nn.softmax(inputs, axis=1)
    onehot = (target == jnp.arange(n_classes).reshape(1, n_classes, 1, 1)
              ).astype(jnp.float32)
    if weight is None:
        weight = [1.0] * n_classes
    loss = 0.0
    for i in range(n_classes):
        s = inputs[:, i].astype(jnp.float32)
        t = onehot[:, i]
        intersect = jnp.sum(s * t)
        y_sum = jnp.sum(t * t)
        z_sum = jnp.sum(s * s)
        dice = 1.0 - (2.0 * intersect + SMOOTH) / (z_sum + y_sum + SMOOTH)
        loss = loss + dice * weight[i]
    return loss / n_classes


if __name__ == "__main__":
    # DiceLoss has no learnable parameters; n_classes is the only config.
    n_classes = 4
    N, H, W = 2, 16, 16

    key = jax.random.PRNGKey(0)
    k_in, k_tgt = jax.random.split(key)
    # Scores (e.g. post-softmax probabilities) and integer label map.
    inputs = jax.random.uniform(k_in, (N, n_classes, H, W), dtype=jnp.float32)
    target = jax.random.randint(k_tgt, (N, 1, H, W), 0, n_classes,
                                dtype=jnp.int32)

    loss = dice_loss(inputs, target, n_classes)
    loss = jax.block_until_ready(loss)

    ref = _ref_dice_loss(inputs, target, n_classes)
    assert jnp.allclose(loss, ref, rtol=1e-5, atol=1e-6), (loss, ref)

    print("KERNEL_OK")
</pallas_src>

<mosaic_0001>
module attributes {stable_mosaic.version = 11 : i64} {
  func.func @_dice_partial_kernel(%arg0: i32, %arg1: i32, %arg2: memref<1x4x16x16xf32, #tpu.memory_space<vmem>>, %arg3: memref<1x1x16x16xi32, #tpu.memory_space<vmem>>, %arg4: memref<1x4x3x16xf32, #tpu.memory_space<vmem>>) attributes {dimension_semantics = [#tpu.dimension_semantics<parallel>, #tpu.dimension_semantics<arbitrary>], iteration_bounds = array<i64: 2, 1>, scalar_prefetch = 0 : i64, scratch_operands = 0 : i64, tpu.core_type = #tpu.core_type<tc>, window_params = [{transform_indices = @transform_0, window_bounds = array<i64: 1, 4, 16, 16>}, {transform_indices = @transform_1, window_bounds = array<i64: 1, 1, 16, 16>}, {transform_indices = @transform_2, window_bounds = array<i64: 1, 4, 3, 16>}]} {
    %c0_i32 = arith.constant 0 : i32
    %0 = arith.cmpi eq, %arg1, %c0_i32 : i32
    %1 = arith.extui %0 : i1 to i32
    %c0_i32_0 = arith.constant 0 : i32
    %2 = arith.cmpi ne, %1, %c0_i32_0 : i32
    scf.if %2 {
      %cst_65 = arith.constant 0.000000e+00 : f32
      %93 = vector.broadcast %cst_65 : f32 to vector<1x4x3x16xf32>
      %c0_66 = arith.constant 0 : index
      %c0_67 = arith.constant 0 : index
      %c0_68 = arith.constant 0 : index
      %c0_69 = arith.constant 0 : index
      %94 = vector.load %arg4[%c0_66, %c0_67, %c0_68, %c0_69] : memref<1x4x3x16xf32, #tpu.memory_space<vmem>>, vector<1x4x3x16xf32>
      tpu.vector_store %arg4[%c0_66, %c0_67, %c0_68, %c0_69], %93 {strides = array<i32>} : memref<1x4x3x16xf32, #tpu.memory_space<vmem>>, vector<1x4x3x16xf32>,
    } else {
    }
    %c0 = arith.constant 0 : index
    %c0_1 = arith.constant 0 : index
    %c0_2 = arith.constant 0 : index
    %c0_3 = arith.constant 0 : index
    %3 = vector.load %arg3[%c0, %c0_1, %c0_2, %c0_3] : memref<1x1x16x16xi32, #tpu.memory_space<vmem>>, vector<1x1x16x16xi32>
    %4 = vector.shape_cast %3 : vector<1x1x16x16xi32> to vector<16x16xi32>
    %c0_4 = arith.constant 0 : index
    %c0_5 = arith.constant 0 : index
    %c0_6 = arith.constant 0 : index
    %c0_7 = arith.constant 0 : index
    %5 = vector.load %arg2[%c0_4, %c0_5, %c0_6, %c0_7] : memref<1x4x16x16xf32, #tpu.memory_space<vmem>>, vector<1x1x16x16xf32>
    %6 = vector.shape_cast %5 : vector<1x1x16x16xf32> to vector<16x16xf32>
    %c0_i32_8 = arith.constant 0 : i32
    %7 = vector.broadcast %c0_i32_8 : i32 to vector<16x16xi32>
    %8 = arith.cmpi eq, %4, %7 : vector<16x16xi32>
    %cst = arith.constant 0.000000e+00 : f32
    %9 = vector.broadcast %cst : f32 to vector<16x16xf32>
    %10 = arith.select %8, %6, %9 : vector<16x16xi1>, vector<16x16xf32>
    %cst_9 = arith.constant dense<0.000000e+00> : vector<16xf32>
    %11 = vector.multi_reduction <add>, %10, %cst_9 [0] : vector<16x16xf32> to vector<16xf32>
    %12 = vector.shape_cast %11 : vector<16xf32> to vector<1x16xf32>
    %13 = arith.extui %8 : vector<16x16xi1> to vector<16x16xi32>
    %14 = arith.sitofp %13 : vector<16x16xi32> to vector<16x16xf32>
    %cst_10 = arith.constant dense<0.000000e+00> : vector<16xf32>
    %15 = vector.multi_reduction <add>, %14, %cst_10 [0] : vector<16x16xf32> to vector<16xf32>
    %16 = vector.shape_cast %15 : vector<16xf32> to vector<1x16xf32>
    %17 = arith.mulf %6, %6 : vector<16x16xf32>
    %cst_11 = arith.constant dense<0.000000e+00> : vector<16xf32>
    %18 = vector.multi_reduction <add>, %17, %cst_11 [0] : vector<16x16xf32> to vector<16xf32>
    %19 = vector.shape_cast %18 : vector<16xf32> to vector<1x16xf32>
    %20 = tpu.concatenate %12, %16, %19 in 0 : vector<1x16xf32>, vector<1x16xf32>, vector<1x16xf32> -> vector<3x16xf32>
    %c0_12 = arith.constant 0 : index
    %c0_13 = arith.constant 0 : index
    %c0_14 = arith.constant 0 : index
    %c0_15 = arith.constant 0 : index
    %21 = vector.load %arg4[%c0_12, %c0_13, %c0_14, %c0_15] : memref<1x4x3x16xf32, #tpu.memory_space<vmem>>, vector<1x1x3x16xf32>
    %22 = vector.shape_cast %21 : vector<1x1x3x16xf32> to vector<3x16xf32>
    %23 = arith.addf %22, %20 : vector<3x16xf32>
    %c0_16 = arith.constant 0 : index
    %c0_17 = arith.constant 0 : index
    %c0_18 = arith.constant 0 : index
    %c0_19 = arith.constant 0 : index
    %24 = vector.load %arg4[%c0_16, %c0_17, %c0_18, %c0_19] : memref<1x4x3x16xf32, #tpu.memory_space<vmem>>, vector<1x1x3x16xf32>
    %25 = vector.shape_cast %24 : vector<1x1x3x16xf32> to vector<3x16xf32>
    %26 = vector.shape_cast %23 : vector<3x16xf32> to vector<1x1x3x16xf32>
    tpu.vector_store %arg4[%c0_16, %c0_17, %c0_18, %c0_19], %26 {strides = array<i32>} : memref<1x4x3x16xf32, #tpu.memory_space<vmem>>, vector<1x1x3x16xf32>,
    %c0_20 = arith.constant 0 : index
    %c1 = arith.constant 1 : index
    %c0_21 = arith.constant 0 : index
    %c0_22 = arith.constant 0 : index
    %27 = vector.load %arg2[%c0_20, %c1, %c0_21, %c0_22] : memref<1x4x16x16xf32, #tpu.memory_space<vmem>>, vector<1x1x16x16xf32>
    %28 = vector.shape_cast %27 : vector<1x1x16x16xf32> to vector<16x16xf32>
    %c1_i32 = arith.constant 1 : i32
    %29 = vector.broadcast %c1_i32 : i32 to vector<16x16xi32>
    %30 = arith.cmpi eq, %4, %29 : vector<16x16xi32>
    %cst_23 = arith.constant 0.000000e+00 : f32
    %31 = vector.broadcast %cst_23 : f32 to vector<16x16xf32>
    %32 = arith.select %30, %28, %31 : vector<16x16xi1>, vector<16x16xf32>
    %cst_24 = arith.constant dense<0.000000e+00> : vector<16xf32>
    %33 = vector.multi_reduction <add>, %32, %cst_24 [0] : vector<16x16xf32> to vector<16xf32>
    %34 = vector.shape_cast %33 : vector<16xf32> to vector<1x16xf32>
    %35 = arith.extui %30 : vector<16x16xi1> to vector<16x16xi32>
    %36 = arith.sitofp %35 : vector<16x16xi32> to vector<16x16xf32>
    %cst_25 = arith.constant dense<0.000000e+00> : vector<16xf32>
    %37 = vector.multi_reduction <add>, %36, %cst_25 [0] : vector<16x16xf32> to vector<16xf32>
    %38 = vector.shape_cast %37 : vector<16xf32> to vector<1x16xf32>
    %39 = arith.mulf %28, %28 : vector<16x16xf32>
    %cst_26 = arith.constant dense<0.000000e+00> : vector<16xf32>
    %40 = vector.multi_reduction <add>, %39, %cst_26 [0] : vector<16x16xf32> to vector<16xf32>
    %41 = vector.shape_cast %40 : vector<16xf32> to vector<1x16xf32>
    %42 = tpu.concatenate %34, %38, %41 in 0 : vector<1x16xf32>, vector<1x16xf32>, vector<1x16xf32> -> vector<3x16xf32>
    %c0_27 = arith.constant 0 : index
    %c1_28 = arith.constant 1 : index
    %c0_29 = arith.constant 0 : index
    %c0_30 = arith.constant 0 : index
    %43 = vector.load %arg4[%c0_27, %c1_28, %c0_29, %c0_30] : memref<1x4x3x16xf32, #tpu.memory_space<vmem>>, vector<1x1x3x16xf32>
    %44 = vector.shape_cast %43 : vector<1x1x3x16xf32> to vector<3x16xf32>
    %45 = arith.addf %44, %42 : vector<3x16xf32>
    %c0_31 = arith.constant 0 : index
    %c1_32 = arith.constant 1 : index
    %c0_33 = arith.constant 0 : index
    %c0_34 = arith.constant 0 : index
    %46 = vector.load %arg4[%c0_31, %c1_32, %c0_33, %c0_34] : memref<1x4x3x16xf32, #tpu.memory_space<vmem>>, vector<1x1x3x16xf32>
    %47 = vector.shape_cast %46 : vector<1x1x3x16xf32> to vector<3x16xf32>
    %48 = vector.shape_cast %45 : vector<3x16xf32> to vector<1x1x3x16xf32>
    tpu.vector_store %arg4[%c0_31, %c1_32, %c0_33, %c0_34], %48 {strides = array<i32>} : memref<1x4x3x16xf32, #tpu.memory_space<vmem>>, vector<1x1x3x16xf32>,
    %c0_35 = arith.constant 0 : index
    %c2 = arith.constant 2 : index
    %c0_36 = arith.constant 0 : index
    %c0_37 = arith.constant 0 : index
    %49 = vector.load %arg2[%c0_35, %c2, %c0_36, %c0_37] : memref<1x4x16x16xf32, #tpu.memory_space<vmem>>, vector<1x1x16x16xf32>
    %50 = vector.shape_cast %49 : vector<1x1x16x16xf32> to vector<16x16xf32>
    %c2_i32 = arith.constant 2 : i32
    %51 = vector.broadcast %c2_i32 : i32 to vector<16x16xi32>
    %52 = arith.cmpi eq, %4, %51 : vector<16x16xi32>
    %cst_38 = arith.constant 0.000000e+00 : f32
    %53 = vector.broadcast %cst_38 : f32 to vector<16x16xf32>
    %54 = arith.select %52, %50, %53 : vector<16x16xi1>, vector<16x16xf32>
    %cst_39 = arith.constant dense<0.000000e+00> : vector<16xf32>
    %55 = vector.multi_reduction <add>, %54, %cst_39 [0] : vector<16x16xf32> to vector<16xf32>
    %56 = vector.shape_cast %55 : vector<16xf32> to vector<1x16xf32>
    %57 = arith.extui %52 : vector<16x16xi1> to vector<16x16xi32>
    %58 = arith.sitofp %57 : vector<16x16xi32> to vector<16x16xf32>
    %cst_40 = arith.constant dense<0.000000e+00> : vector<16xf32>
    %59 = vector.multi_reduction <add>, %58, %cst_40 [0] : vector<16x16xf32> to vector<16xf32>
    %60 = vector.shape_cast %59 : vector<16xf32> to vector<1x16xf32>
    %61 = arith.mulf %50, %50 : vector<16x16xf32>
    %cst_41 = arith.constant dense<0.000000e+00> : vector<16xf32>
    %62 = vector.multi_reduction <add>, %61, %cst_41 [0] : vector<16x16xf32> to vector<16xf32>
    %63 = vector.shape_cast %62 : vector<16xf32> to vector<1x16xf32>
    %64 = tpu.concatenate %56, %60, %63 in 0 : vector<1x16xf32>, vector<1x16xf32>, vector<1x16xf32> -> vector<3x16xf32>
    %c0_42 = arith.constant 0 : index
    %c2_43 = arith.constant 2 : index
    %c0_44 = arith.constant 0 : index
    %c0_45 = arith.constant 0 : index
    %65 = vector.load %arg4[%c0_42, %c2_43, %c0_44, %c0_45] : memref<1x4x3x16xf32, #tpu.memory_space<vmem>>, vector<1x1x3x16xf32>
    %66 = vector.shape_cast %65 : vector<1x1x3x16xf32> to vector<3x16xf32>
    %67 = arith.addf %66, %64 : vector<3x16xf32>
    %c0_46 = arith.constant 0 : index
    %c2_47 = arith.constant 2 : index
    %c0_48 = arith.constant 0 : index
    %c0_49 = arith.constant 0 : index
    %68 = vector.load %arg4[%c0_46, %c2_47, %c0_48, %c0_49] : memref<1x4x3x16xf32, #tpu.memory_space<vmem>>, vector<1x1x3x16xf32>
    %69 = vector.shape_cast %68 : vector<1x1x3x16xf32> to vector<3x16xf32>
    %70 = vector.shape_cast %67 : vector<3x16xf32> to vector<1x1x3x16xf32>
    tpu.vector_store %arg4[%c0_46, %c2_47, %c0_48, %c0_49], %70 {strides = array<i32>} : memref<1x4x3x16xf32, #tpu.memory_space<vmem>>, vector<1x1x3x16xf32>,
    %c0_50 = arith.constant 0 : index
    %c3 = arith.constant 3 : index
    %c0_51 = arith.constant 0 : index
    %c0_52 = arith.constant 0 : index
    %71 = vector.load %arg2[%c0_50, %c3, %c0_51, %c0_52] : memref<1x4x16x16xf32, #tpu.memory_space<vmem>>, vector<1x1x16x16xf32>
    %72 = vector.shape_cast %71 : vector<1x1x16x16xf32> to vector<16x16xf32>
    %c3_i32 = arith.constant 3 : i32
    %73 = vector.broadcast %c3_i32 : i32 to vector<16x16xi32>
    %74 = arith.cmpi eq, %4, %73 : vector<16x16xi32>
    %cst_53 = arith.constant 0.000000e+00 : f32
    %75 = vector.broadcast %cst_53 : f32 to vector<16x16xf32>
    %76 = arith.select %74, %72, %75 : vector<16x16xi1>, vector<16x16xf32>
    %cst_54 = arith.constant dense<0.000000e+00> : vector<16xf32>
    %77 = vector.multi_reduction <add>, %76, %cst_54 [0] : vector<16x16xf32> to vector<16xf32>
    %78 = vector.shape_cast %77 : vector<16xf32> to vector<1x16xf32>
    %79 = arith.extui %74 : vector<16x16xi1> to vector<16x16xi32>
    %80 = arith.sitofp %79 : vector<16x16xi32> to vector<16x16xf32>
    %cst_55 = arith.constant dense<0.000000e+00> : vector<16xf32>
    %81 = vector.multi_reduction <add>, %80, %cst_55 [0] : vector<16x16xf32> to vector<16xf32>
    %82 = vector.shape_cast %81 : vector<16xf32> to vector<1x16xf32>
    %83 = arith.mulf %72, %72 : vector<16x16xf32>
    %cst_56 = arith.constant dense<0.000000e+00> : vector<16xf32>
    %84 = vector.multi_reduction <add>, %83, %cst_56 [0] : vector<16x16xf32> to vector<16xf32>
    %85 = vector.shape_cast %84 : vector<16xf32> to vector<1x16xf32>
    %86 = tpu.concatenate %78, %82, %85 in 0 : vector<1x16xf32>, vector<1x16xf32>, vector<1x16xf32> -> vector<3x16xf32>
    %c0_57 = arith.constant 0 : index
    %c3_58 = arith.constant 3 : index
    %c0_59 = arith.constant 0 : index
    %c0_60 = arith.constant 0 : index
    %87 = vector.load %arg4[%c0_57, %c3_58, %c0_59, %c0_60] : memref<1x4x3x16xf32, #tpu.memory_space<vmem>>, vector<1x1x3x16xf32>
    %88 = vector.shape_cast %87 : vector<1x1x3x16xf32> to vector<3x16xf32>
    %89 = arith.addf %88, %86 : vector<3x16xf32>
    %c0_61 = arith.constant 0 : index
    %c3_62 = arith.constant 3 : index
    %c0_63 = arith.constant 0 : index
    %c0_64 = arith.constant 0 : index
    %90 = vector.load %arg4[%c0_61, %c3_62, %c0_63, %c0_64] : memref<1x4x3x16xf32, #tpu.memory_space<vmem>>, vector<1x1x3x16xf32>
    %91 = vector.shape_cast %90 : vector<1x1x3x16xf32> to vector<3x16xf32>
    %92 = vector.shape_cast %89 : vector<3x16xf32> to vector<1x1x3x16xf32>
    tpu.vector_store %arg4[%c0_61, %c3_62, %c0_63, %c0_64], %92 {strides = array<i32>} : memref<1x4x3x16xf32, #tpu.memory_space<vmem>>, vector<1x1x3x16xf32>,
    return
  }
  func.func @transform_0(%arg0: i32, %arg1: i32) -> (i32, i32, i32, i32) {
    %c0_i32 = arith.constant 0 : i32
    %c0_i32_0 = arith.constant 0 : i32
    %c0_i32_1 = arith.constant 0 : i32
    return %arg0, %c0_i32, %arg1, %c0_i32_0 : i32, i32, i32, i32
  }
  func.func @transform_1(%arg0: i32, %arg1: i32) -> (i32, i32, i32, i32) {
    %c0_i32 = arith.constant 0 : i32
    %c0_i32_0 = arith.constant 0 : i32
    %c0_i32_1 = arith.constant 0 : i32
    return %arg0, %c0_i32, %arg1, %c0_i32_0 : i32, i32, i32, i32
  }
  func.func @transform_2(%arg0: i32, %arg1: i32) -> (i32, i32, i32, i32) {
    %c0_i32 = arith.constant 0 : i32
    %c0_i32_0 = arith.constant 0 : i32
    %c0_i32_1 = arith.constant 0 : i32
    %c0_i32_2 = arith.constant 0 : i32
    return %arg0, %c0_i32, %c0_i32_0, %c0_i32_1 : i32, i32, i32, i32
  }
}

</mosaic_0001>

<llo_original>
// kernel: dice_loss.1
$region0: #{dice_loss.1}
  #allocation0 [shape = 'u32[]', space=smem, size = 0x4, offset = 0x4, fixed_abs, tag = 'smem constant byte address 0x4 - core index']
  #allocation1 [shape = 'u32[144,128]{1,0:T(1,128)}', space=vmem, size = 0x12000, scoped, tag = 'internal scratch']
  %s0 = inlined_call_operand.hbm [shape: f32[2,4,16,16], index: 0, kind: input, shape index: {}]
  %s1 = inlined_call_operand.hbm [shape: s32[2,1,16,16], index: 1, kind: input, shape index: {}]
  %s2 = inlined_call_operand.vmem [shape: f32[2,4,3,16], index: 2, kind: output, shape index: {}]
  %s3 = sld [smem:[#allocation0]]
  $region53: #{dice_loss.1} parent=0
    _
  %s5 = ssub.s32 1, %s3
  %s6 = scalar_select 0, %s5, %s3
  $region1: #{dice_loss.1} parent=0
    #allocation2 [shape = 'u8[65536]{0}', space=vmem, size = 0x10000, scoped, tag = 'input window, operand 0']
    #allocation3 [shape = 's32[2]{0}', space=sflag, size = 0x8, scoped, tag = 'scoped memory for dice_loss.1']
    #allocation4 [shape = 'u8[16384]{0}', space=vmem, size = 0x4000, scoped, tag = 'input window, operand 1']
    #allocation5 [shape = 's32[2]{0}', space=sflag, size = 0x8, scoped, tag = 'scoped memory for dice_loss.1']
    %7 = vsyncpa [#allocation3], 0
    %s8 = scalar_lea.sflag [#allocation3], 1
    %9 = vsyncpa %s8, 0
    %10 = vsyncpa [#allocation5], 0
    %s11 = scalar_lea.sflag [#allocation5], 1
    %12 = vsyncpa %s11, 0
    loop: start=0, step=1, limit=4
    $region2: #{dice_loss.1} parent=1 // loop_pre_header
      _
    $region3: #{dice_loss.1} parent=1 // loop_header
      %s14 = sphi 0, %s18
      %p15 = scmp.ge.s32.totalorder %s14, 4
      %s21 = sphi 0, %s33
      %s22 = sphi 0, %s29
      %s23 = sphi 0, %s21
      %s24 = sphi 0, %s22
      %s25 = sphi 0, %s23
      %s26 = sphi 0, %s24
      %s38 = sphi 0, %s40
      %s41 = sphi 0, %s38
      %s42 = sphi 0, %s41
      %s58 = sphi 0, %s42
      %s66 = sphi 0, %s68
      %s69 = sphi 0, %s66
      %s70 = sphi 0, %s69
      %s86 = sphi 0, %s70
      %s92 = sphi 0, %s94
      %s95 = sphi 0, %s92
      %s96 = sphi 0, %s95
      %s112 = sphi 0, %s96
    $region4: #{dice_loss.1} parent=1 // loop_header_branch
      %17 = sbr.rel (%p15) target = $region8
    $region5: #{dice_loss.1} parent=1 // loop_body
      %s19 = ssub.s32 %s14, 1
      %s20 = ssub.s32 %s14, 2
      %s27 = sadd.s32 1, %s22
      %p28 = scmp.ge.s32.totalorder %s27, 1
      %s29 = scalar_select %p28, 0, %s27
      %s30 = sadd.s32 1, %s21
      %s31 = scalar_select %p28, %s30, %s21
      %p32 = scmp.ge.s32.totalorder %s31, 2
      %s33 = scalar_select %p32, 0, %s31
      %s34 = ssub.s32 %s21, %s33
      %s35 = ssub.s32 %s22, %s29
      %s36 = sor.u32 %s34, %s35
      %p37 = scmp.eq.s32.totalorder %s36, 0
      %s39 = sadd.s32 %s38, 1
      %s40 = scalar_select %p37, %s38, %s39
      %p43 = pneg %p37
      %p44 = scmp.eq.s32.totalorder %s14, 1
      %p45 = por %p43, %p44
      %p46 = scmp.ne.s32.totalorder %s38, %s41
      %p47 = scmp.eq.s32.totalorder %s14, 0
      %p48 = por %p46, %p47
      %p49 = scmp.ne.s32.totalorder %s38, %s41
      %p50 = scmp.eq.s32.totalorder %s19, 1
      %p51 = por %p49, %p50
      %p52 = scmp.ne.s32.totalorder %s41, %s42
      %p53 = scmp.eq.s32.totalorder %s19, 0
      %p54 = por %p52, %p53
      %p55 = scmp.ne.s32.totalorder %s41, %s42
      %p56 = scmp.eq.s32.totalorder %s20, 1
      %p57 = por %p55, %p56
      %p59 = scmp.ne.s32.totalorder %s42, %s58
      %p60 = scmp.eq.s32.totalorder %s20, 0
      %p61 = por %p59, %p60
      %s62 = ssub.s32 %s21, %s33
      %s63 = ssub.s32 %s22, %s29
      %s64 = sor.u32 %s62, %s63
      %p65 = scmp.eq.s32.totalorder %s64, 0
      %s67 = sadd.s32 %s66, 1
      %s68 = scalar_select %p65, %s66, %s67
      %p71 = pneg %p65
      %p72 = scmp.eq.s32.totalorder %s14, 1
      %p73 = por %p71, %p72
      %p74 = scmp.ne.s32.totalorder %s66, %s69
      %p75 = scmp.eq.s32.totalorder %s14, 0
      %p76 = por %p74, %p75
      %p77 = scmp.ne.s32.totalorder %s66, %s69
      %p78 = scmp.eq.s32.totalorder %s19, 1
      %p79 = por %p77, %p78
      %p80 = scmp.ne.s32.totalorder %s69, %s70
      %p81 = scmp.eq.s32.totalorder %s19, 0
      %p82 = por %p80, %p81
      %p83 = scmp.ne.s32.totalorder %s69, %s70
      %p84 = scmp.eq.s32.totalorder %s20, 1
      %p85 = por %p83, %p84
      %p87 = scmp.ne.s32.totalorder %s70, %s86
      %p88 = scmp.eq.s32.totalorder %s20, 0
      %p89 = por %p87, %p88
      %s90 = ssub.s32 %s21, %s33
      %p91 = scmp.eq.s32.totalorder %s90, 0
      %s93 = sadd.s32 %s92, 1
      %s94 = scalar_select %p91, %s92, %s93
      %p97 = pneg %p91
      %p98 = scmp.eq.s32.totalorder %s14, 1
      %p99 = por %p97, %p98
      %p100 = scmp.ne.s32.totalorder %s92, %s95
      %p101 = scmp.eq.s32.totalorder %s14, 0
      %p102 = por %p100, %p101
      %p103 = scmp.ne.s32.totalorder %s92, %s95
      %p104 = scmp.eq.s32.totalorder %s19, 1
      %p105 = por %p103, %p104
      %p106 = scmp.ne.s32.totalorder %s95, %s96
      %p107 = scmp.eq.s32.totalorder %s19, 0
      %p108 = por %p106, %p107
      %p109 = scmp.ne.s32.totalorder %s95, %s96
      %p110 = scmp.eq.s32.totalorder %s20, 1
      %p111 = por %p109, %p110
      %p113 = scmp.ne.s32.totalorder %s96, %s112
      %p114 = scmp.eq.s32.totalorder %s20, 0
      %p115 = por %p113, %p114
      %p116 = scmp.le.s32.totalorder 1, %s14
      %p117 = scmp.lt.s32.totalorder %s14, 3
      %p118 = pnand %p116, %p117
      %p119 = pneg %p118
      // Predicated region
      $region9: #{dice_loss.1} parent=5 // pred_check
        _
      $region10: #{dice_loss.1} parent=5 // pred_check_branch
        %121 = sbr.rel (%p118) target = $region12
      $region11: #{dice_loss.1} parent=5 // pred_region
        %s122 = ssub.s32 %s14, 1
      $region12: #{dice_loss.1} parent=5 // pred_fallthru
        _
      %p123 = scmp.lt.s32.totalorder %s14, 2
      // Predicated region
      $region13: #{dice_loss.1} parent=5 // pred_check
        %p124 = pneg %p123
      $region14: #{dice_loss.1} parent=5 // pred_check_branch
        %126 = sbr.rel (%p124) target = $region16
      $region15: #{dice_loss.1} parent=5 // pred_region
        // Predicated region
        $region17: #{dice_loss.1} parent=15 // pred_check
          %p127 = pneg %p48
        $region18: #{dice_loss.1} parent=15 // pred_check_branch
          %129 = sbr.rel (%p127) target = $region20
        $region19: #{dice_loss.1} parent=15 // pred_region
          %s130 = sand.u32 %s38, 1
          %s131 = scalar_lea.sflag [#allocation3], %s130
          %s132 = sand.u32 %s38, 1
          %s133 = smul.addr %s132, 64
          %s134 = scalar_lea.vmem [#allocation2], %s133
          %s135 = smul.u32 2, %s22
          %s137 = ssub.s32 1024, 1024
          %138 = vsyncadd %s131, %s137
          %s139 = smul.addr %s21, 8
          %s140 = sadd.s32 %s135, %s139
          %s141 = smul.addr %s140, 128
          %s142 = scalar_lea.hbm %s0, %s141
          %s143 = sshll.u32 %s134, 4
          %s144 = int_to_ptr.vmem [resolvable:$true] %s143
          %149 = dma.hbm_to_vmem [thread:$0]  %s142, 1024, %s144, %s131, 128, 128, 8
        $region20: #{dice_loss.1} parent=15 // pred_fallthru
          _
        // Predicated region
        $region21: #{dice_loss.1} parent=15 // pred_check
          %p150 = pneg %p76
        $region22: #{dice_loss.1} parent=15 // pred_check_branch
          %152 = sbr.rel (%p150) target = $region24
        $region23: #{dice_loss.1} parent=15 // pred_region
          %s153 = sand.u32 %s66, 1
          %s154 = scalar_lea.sflag [#allocation5], %s153
          %s155 = sand.u32 %s66, 1
          %s156 = smul.addr %s155, 16
          %s157 = scalar_lea.vmem [#allocation4], %s156
          %s158 = smul.u32 2, %s22
          %s160 = ssub.s32 256, 256
          %161 = vsyncadd %s154, %s160
          %s162 = smul.addr %s21, 2
          %s163 = sadd.s32 %s158, %s162
          %s164 = smul.addr %s163, 128
          %s165 = scalar_lea.hbm %s1, %s164
          %s166 = sshll.u32 %s157, 4
          %s167 = int_to_ptr.vmem [resolvable:$true] %s166
          %172 = dma.hbm_to_vmem [thread:$0]  %s165, 256, %s167, %s154, 128, 128, 8
        $region24: #{dice_loss.1} parent=15 // pred_fallthru
          _
      $region16: #{dice_loss.1} parent=5 // pred_fallthru
        _
      %p173 = scmp.le.s32.totalorder 1, %s14
      %p174 = scmp.lt.s32.totalorder %s14, 3
      %p175 = pnand %p173, %p174
      %p176 = pneg %p175
      // Predicated region
      $region25: #{dice_loss.1} parent=5 // pred_check
        _
      $region26: #{dice_loss.1} parent=5 // pred_check_branch
        %178 = sbr.rel (%p175) target = $region28
      $region27: #{dice_loss.1} parent=5 // pred_region
        %s179 = ssub.s32 %s14, 1
        %s180 = sand.u32 %s41, 1
        %s181 = scalar_lea.sflag [#allocation3], %s180
        %s182 = sand.u32 %s41, 1
        %s183 = smul.addr %s182, 64
        %s184 = scalar_lea.vmem [#allocation2], %s183
        // Predicated region
        $region29: #{dice_loss.1} parent=27 // pred_check
          %p185 = pneg %p54
        $region30: #{dice_loss.1} parent=27 // pred_check_branch
          %187 = sbr.rel (%p185) target = $region32
        $region31: #{dice_loss.1} parent=27 // pred_region
          %188 = dma.done %s181, 1024
        $region32: #{dice_loss.1} parent=27 // pred_fallthru
          _
        %s189 = sand.u32 %s69, 1
        %s190 = scalar_lea.sflag [#allocation5], %s189
        %s191 = sand.u32 %s69, 1
        %s192 = smul.addr %s191, 16
        %s193 = scalar_lea.vmem [#allocation4], %s192
        // Predicated region
        $region33: #{dice_loss.1} parent=27 // pred_check
          %p194 = pneg %p82
        $region34: #{dice_loss.1} parent=27 // pred_check_branch
          %196 = sbr.rel (%p194) target = $region36
        $region35: #{dice_loss.1} parent=27 // pred_region
          %197 = dma.done %s190, 256
        $region36: #{dice_loss.1} parent=27 // pred_fallthru
          _
        %s198 = sand.u32 %s41, 1
        %s199 = scalar_lea.sflag [#allocation3], %s198
        %s200 = sand.u32 %s41, 1
        %s201 = smul.addr %s200, 64
        %s202 = scalar_lea.vmem [#allocation2], %s201
        %p203 = pneg %p54
        %p204 = pneg %p51
        %s205 = sand.u32 %s69, 1
        %s206 = scalar_lea.sflag [#allocation5], %s205
        %s207 = sand.u32 %s69, 1
        %s208 = smul.addr %s207, 16
        %s209 = scalar_lea.vmem [#allocation4], %s208
        %p210 = pneg %p82
        %p211 = pneg %p79
        %p212 = pneg %p108
        %p213 = pneg %p105
        %p214 = scmp.lt.s32.totalorder %s23, 1
        %s215 = scalar_select %p214, %s23, 1
        %s216 = smul.addr %s215, 4
        %s217 = smul.addr %s216, 4
        %s218 = scalar_lea.vmem %s2, %s217
        %s219 = smul.u32 2, %s24
        %s220 = smul.u32 2, %s24
        %p221 = scmp.lt.s32.totalorder %s23, 1
        %s222 = scalar_select %p221, %s23, 1
        %s223 = smul.addr %s222, 4
        %s224 = smul.addr %s223, 4
        %s225 = scalar_lea.vmem %s2, %s224
        %p226 = scmp.eq.s32.totalorder %s24, 0
        // Predicated region
        $region37: #{dice_loss.1} parent=27 // pred_check
          %p227 = pneg %p226
        $region38: #{dice_loss.1} parent=27 // pred_check_branch
          %229 = sbr.rel (%p227) target = $region40
        $region39: #{dice_loss.1} parent=27 // pred_region
          %vm230 = vcmask 124928
          %231 = vst.msk [vmem:[%s225] sm:$0x7] %vm230, 0.0
          %232 = vst.msk [vmem:[%s225 + $0x4] sm:$0x7] %vm230, 0.0
          %233 = vst.msk [vmem:[%s225 + $0x8] sm:$0x7] %vm230, 0.0
          %234 = vst.msk [vmem:[%s225 + $0xc] sm:$0x7] %vm230, 0.0
        $region40: #{dice_loss.1} parent=27 // pred_fallthru
          _
        %v235 = vld [vmem:[%s193] sm:$0xff]
        %v236 = vld [vmem:[%s193 + $0x8] sm:$0xff]
        %v237 = vld [vmem:[%s184] sm:$0xff]
        %v238 = vld [vmem:[%s184 + $0x8] sm:$0xff]
        %vm239 = vcmp.eq.s32.totalorder %v235, 0
        %vm240 = vcmp.eq.s32.totalorder %v236, 0
        %v241 = vsel %vm239, %v237, 0.0
        %v242 = vsel %vm240, %v238, 0.0
        %vm243 = vcmask 130048
        %v244 = vsel %vm243, %v241, 0.0
        %v245 = vsel %vm243, %v242, 0.0
        %v246 = vadd.f32 %v244, %v245
        %v247 = vrot.slane %v246, 4
        %v248 = vadd.f32 %v246, %v247
        %v249 = vrot.slane %v248, 2
        %v250 = vadd.f32 %v248, %v249
        %v251 = vrot.slane %v250, 1
        %v252 = vadd.f32 %v250, %v251
        %v253 = vsel %vm239, 1, 0
        %v254 = vsel %vm240, 1, 0
        %v255 = vcvt.s32.f32 %v253
        %v256 = vcvt.s32.f32 %v254
        %v257 = vsel %vm243, %v255, 0.0
        %v258 = vsel %vm243, %v256, 0.0
        %v259 = vadd.f32 %v257, %v258
        %v260 = vrot.slane %v259, 4
        %v261 = vadd.f32 %v259, %v260
        %v262 = vrot.slane %v261, 2
        %v263 = vadd.f32 %v261, %v262
        %v264 = vrot.slane %v263, 1
        %v265 = vadd.f32 %v263, %v264
        %v266 = vmul.f32 %v237, %v237
        %v267 = vmul.f32 %v238, %v238
        %v268 = vsel %vm243, %v266, 0.0
        %v269 = vsel %vm243, %v267, 0.0
        %v270 = vadd.f32 %v268, %v269
        %v271 = vrot.slane %v270, 4
        %v272 = vadd.f32 %v270, %v271
        %v273 = vrot.slane %v272, 2
        %v274 = vadd.f32 %v272, %v273
        %v275 = vrot.slane %v274, 1
        %v276 = vadd.f32 %v274, %v275
        %vm277 = vcmask 1040384
        %v278 = vsel %vm277, %v252, %v265
        %vm279 = vcmask 1041408
        %v280 = vsel %vm279, %v278, %v276
        %v281 = vld [vmem:[%s225] sm:$0x7]
        %v282 = vadd.f32 %v281, %v280
        %vm283 = vcmask 124928
        %284 = vst.msk [vmem:[%s225] sm:$0x7] %vm283, %v282
        %s285 = scalar_lea.vmem %s184, 16 [#allocation2]
        %v286 = vld [vmem:[%s285] sm:$0xff]
        %v287 = vld [vmem:[%s285 + $0x8] sm:$0xff]
        %vm288 = vcmp.eq.s32.totalorder %v235, 1
        %vm289 = vcmp.eq.s32.totalorder %v236, 1
        %v290 = vsel %vm288, %v286, 0.0
        %v291 = vsel %vm289, %v287, 0.0
        %v292 = vsel %vm243, %v290, 0.0
        %v293 = vsel %vm243, %v291, 0.0
        %v294 = vadd.f32 %v292, %v293
        %v295 = vrot.slane %v294, 4
        %v296 = vadd.f32 %v294, %v295
        %v297 = vrot.slane %v296, 2
        %v298 = vadd.f32 %v296, %v297
        %v299 = vrot.slane %v298, 1
        %v300 = vadd.f32 %v298, %v299
        %v301 = vsel %vm288, 1, 0
        %v302 = vsel %vm289, 1, 0
        %v303 = vcvt.s32.f32 %v301
        %v304 = vcvt.s32.f32 %v302
        %v305 = vsel %vm243, %v303, 0.0
        %v306 = vsel %vm243, %v304, 0.0
        %v307 = vadd.f32 %v305, %v306
        %v308 = vrot.slane %v307, 4
        %v309 = vadd.f32 %v307, %v308
        %v310 = vrot.slane %v309, 2
        %v311 = vadd.f32 %v309, %v310
        %v312 = vrot.slane %v311, 1
        %v313 = vadd.f32 %v311, %v312
        %v314 = vmul.f32 %v286, %v286
        %v315 = vmul.f32 %v287, %v287
        %v316 = vsel %vm243, %v314, 0.0
        %v317 = vsel %vm243, %v315, 0.0
        %v318 = vadd.f32 %v316, %v317
        %v319 = vrot.slane %v318, 4
        %v320 = vadd.f32 %v318, %v319
        %v321 = vrot.slane %v320, 2
        %v322 = vadd.f32 %v320, %v321
        %v323 = vrot.slane %v322, 1
        %v324 = vadd.f32 %v322, %v323
        %v325 = vsel %vm277, %v300, %v313
        %v326 = vsel %vm279, %v325, %v324
        %s327 = scalar_lea.vmem %s225, 4
        %v328 = vld [vmem:[%s327] sm:$0x7]
        %v329 = vadd.f32 %v328, %v326
        %330 = vst.msk [vmem:[%s327] sm:$0x7] %vm283, %v329
        %s331 = scalar_lea.vmem %s184, 32 [#allocation2]
        %v332 = vld [vmem:[%s331] sm:$0xff]
        %v333 = vld [vmem:[%s331 + $0x8] sm:$0xff]
        %vm334 = vcmp.eq.s32.totalorder %v235, 2
        %vm335 = vcmp.eq.s32.totalorder %v236, 2
        %v336 = vsel %vm334, %v332, 0.0
        %v337 = vsel %vm335, %v333, 0.0
        %v338 = vsel %vm243, %v336, 0.0
        %v339 = vsel %vm243, %v337, 0.0
        %v340 = vadd.f32 %v338, %v339
        %v341 = vrot.slane %v340, 4
        %v342 = vadd.f32 %v340, %v341
        %v343 = vrot.slane %v342, 2
        %v344 = vadd.f32 %v342, %v343
        %v345 = vrot.slane %v344, 1
        %v346 = vadd.f32 %v344, %v345
        %v347 = vsel %vm334, 1, 0
        %v348 = vsel %vm335, 1, 0
        %v349 = vcvt.s32.f32 %v347
        %v350 = vcvt.s32.f32 %v348
        %v351 = vsel %vm243, %v349, 0.0
        %v352 = vsel %vm243, %v350, 0.0
        %v353 = vadd.f32 %v351, %v352
        %v354 = vrot.slane %v353, 4
        %v355 = vadd.f32 %v353, %v354
        %v356 = vrot.slane %v355, 2
        %v357 = vadd.f32 %v355, %v356
        %v358 = vrot.slane %v357, 1
        %v359 = vadd.f32 %v357, %v358
        %v360 = vmul.f32 %v332, %v332
        %v361 = vmul.f32 %v333, %v333
        %v362 = vsel %vm243, %v360, 0.0
        %v363 = vsel %vm243, %v361, 0.0
        %v364 = vadd.f32 %v362, %v363
        %v365 = vrot.slane %v364, 4
        %v366 = vadd.f32 %v364, %v365
        %v367 = vrot.slane %v366, 2
        %v368 = vadd.f32 %v366, %v367
        %v369 = vrot.slane %v368, 1
        %v370 = vadd.f32 %v368, %v369
        %v371 = vsel %vm277, %v346, %v359
        %v372 = vsel %vm279, %v371, %v370
        %s373 = scalar_lea.vmem %s225, 8
        %v374 = vld [vmem:[%s373] sm:$0x7]
        %v375 = vadd.f32 %v374, %v372
        %376 = vst.msk [vmem:[%s373] sm:$0x7] %vm283, %v375
        %s377 = scalar_lea.vmem %s184, 48 [#allocation2]
        %v378 = vld [vmem:[%s377] sm:$0xff]
        %v379 = vld [vmem:[%s377 + $0x8] sm:$0xff]
        %vm380 = vcmp.eq.s32.totalorder %v235, 3
        %vm381 = vcmp.eq.s32.totalorder %v236, 3
        %v382 = vsel %vm380, %v378, 0.0
        %v383 = vsel %vm381, %v379, 0.0
        %v384 = vsel %vm243, %v382, 0.0
        %v385 = vsel %vm243, %v383, 0.0
        %v386 = vadd.f32 %v384, %v385
        %v387 = vrot.slane %v386, 4
        %v388 = vadd.f32 %v386, %v387
        %v389 = vrot.slane %v388, 2
        %v390 = vadd.f32 %v388, %v389
        %v391 = vrot.slane %v390, 1
        %v392 = vadd.f32 %v390, %v391
        %v393 = vsel %vm380, 1, 0
        %v394 = vsel %vm381, 1, 0
        %v395 = vcvt.s32.f32 %v393
        %v396 = vcvt.s32.f32 %v394
        %v397 = vsel %vm243, %v395, 0.0
        %v398 = vsel %vm243, %v396, 0.0
        %v399 = vadd.f32 %v397, %v398
        %v400 = vrot.slane %v399, 4
        %v401 = vadd.f32 %v399, %v400
        %v402 = vrot.slane %v401, 2
        %v403 = vadd.f32 %v401, %v402
        %v404 = vrot.slane %v403, 1
        %v405 = vadd.f32 %v403, %v404
        %v406 = vmul.f32 %v378, %v378
        %v407 = vmul.f32 %v379, %v379
        %v408 = vsel %vm243, %v406, 0.0
        %v409 = vsel %vm243, %v407, 0.0
        %v410 = vadd.f32 %v408, %v409
        %v411 = vrot.slane %v410, 4
        %v412 = vadd.f32 %v410, %v411
        %v413 = vrot.slane %v412, 2
        %v414 = vadd.f32 %v412, %v413
        %v415 = vrot.slane %v414, 1
        %v416 = vadd.f32 %v414, %v415
        %v417 = vsel %vm277, %v392, %v405
        %v418 = vsel %vm279, %v417, %v416
        %s419 = scalar_lea.vmem %s225, 12
        %v420 = vld [vmem:[%s419] sm:$0x7]
        %v421 = vadd.f32 %v420, %v418
        %422 = vst.msk [vmem:[%s419] sm:$0x7] %vm283, %v421
        %p423 = scmp.lt.s32.totalorder %s23, 1
        %s424 = scalar_select %p423, %s23, 1
        %s425 = smul.addr %s424, 4
        %s426 = smul.addr %s425, 4
        %s427 = scalar_lea.vmem %s2, %s426
        // Predicated region
        $region41: #{dice_loss.1} parent=27 // pred_check
          %p428 = pneg %p105
        $region42: #{dice_loss.1} parent=27 // pred_check_branch
          %430 = sbr.rel (%p428) target = $region44
        $region43: #{dice_loss.1} parent=27 // pred_region
          _
        $region44: #{dice_loss.1} parent=27 // pred_fallthru
          _
      $region28: #{dice_loss.1} parent=5 // pred_fallthru
        _
      %p431 = scmp.le.s32.totalorder 2, %s14
      // Predicated region
      $region45: #{dice_loss.1} parent=5 // pred_check
        %p432 = pneg %p431
      $region46: #{dice_loss.1} parent=5 // pred_check_branch
        %434 = sbr.rel (%p432) target = $region48
      $region47: #{dice_loss.1} parent=5 // pred_region
        %s435 = ssub.s32 %s14, 2
        // Predicated region
        $region49: #{dice_loss.1} parent=47 // pred_check
          %p436 = pneg %p111
        $region50: #{dice_loss.1} parent=47 // pred_check_branch
          %438 = sbr.rel (%p436) target = $region52
        $region51: #{dice_loss.1} parent=47 // pred_region
          %p439 = scmp.lt.s32.totalorder %s25, 1
          %s440 = scalar_select %p439, %s25, 1
          %s441 = smul.addr %s440, 4
          %s442 = smul.addr %s441, 4
          %s443 = scalar_lea.vmem %s2, %s442
        $region52: #{dice_loss.1} parent=47 // pred_fallthru
          _
      $region48: #{dice_loss.1} parent=5 // pred_fallthru
        _
    $region6: #{dice_loss.1} parent=1 // loop_footer
      %s18 = sadd.s32 1, %s14
    $region7: #{dice_loss.1} parent=1 // loop_footer_branch
      %13 = sbr.rel target = $region3
    $region8: #{dice_loss.1} parent=1 // loop_exit
      _
    %444 = vsyncpa [#allocation3], 1
    %s445 = scalar_lea.sflag [#allocation3], 1
    %446 = vsyncpa %s445, 1
    %447 = vsyncpa [#allocation5], 1
    %s448 = scalar_lea.sflag [#allocation5], 1
    %449 = vsyncpa %s448, 1

</llo_original>
